<compile_context>
chip_gen: v5e
topology: v5e:2x2
jax: 0.10.0
libtpu: 0.0.40
codegen_flags: <defaults>
</compile_context>

<pallas_src>
import functools

import numpy as np
import jax
import jax.numpy as jnp
from jax.experimental import pallas as pl
from jax.experimental.pallas import tpu as pltpu


def _mlp_kernel(x_ref,
                w1_ref, b1_ref,
                w2_ref, b2_ref,
                w3_ref, b3_ref,
                w4_ref, b4_ref,
                w5t_ref, b5_ref,
                o_ref, *, bf16_act, vpu_first, vpu_last):
    """Activations live as (features, TILE_N): batch on the 128-lane axis."""

    def act(z):
        if bf16_act:
            # v6e/v7x bf16 EUP path; keep activations bf16 end-to-end so the
            # next MXU dot takes native bf16 operands (accumulation stays f32).
            return jnp.tanh(z.astype(jnp.bfloat16))
        return jnp.tanh(z)

    x = x_ref[...]                                     # (D_in, TILE_N) f32

    # --- layer 1: D_in is tiny (e.g. 2) -> lane-broadcast FMAs on the VPU,
    #     skipping a K=2 MXU pass.
    if vpu_first:
        w1 = w1_ref[...]                               # (H, D_in)
        z = w1[:, 0:1] * x[0:1, :]
        for d in range(1, w1.shape[1]):
            z = z + w1[:, d:d + 1] * x[d:d + 1, :]
        z = z + b1_ref[...]
    else:
        z = jnp.dot(w1_ref[...], x,
                    preferred_element_type=jnp.float32) + b1_ref[...]
    h = act(z)                                         # (H, TILE_N)

    # --- layers 2-4: H x H dots on the MXU, f32 accumulation
    def hidden(w_ref, b_ref, h):
        z = jnp.dot(w_ref[...], h,
                    preferred_element_type=jnp.float32) + b_ref[...]
        return act(z)

    h = hidden(w2_ref, b2_ref, h)
    h = hidden(w3_ref, b3_ref, h)
    h = hidden(w4_ref, b4_ref, h)

    # --- layer 5: D_out == 1 -> elementwise multiply + sublane reduction,
    #     skipping an M=1 MXU pass.
    hf = h.astype(jnp.float32)
    if vpu_last:
        y = jnp.sum(w5t_ref[...] * hf, axis=0, keepdims=True) + b5_ref[...]
    else:
        y = jax.lax.dot_general(
            w5t_ref[...], hf,
            dimension_numbers=(((0,), (0,)), ((), ())),
            preferred_element_type=jnp.float32) + b5_ref[...]
    o_ref[...] = y.astype(o_ref.dtype)                 # (D_out, TILE_N), lane-dense


def general_forward(x, params, *, tile_n=8192, bf16_act=False):
    """Forward pass of the 5-layer tanh MLP.

    x: (N, D_in) float32.
    params: PyTorch-layout weights w_k of shape (out, in), biases b_k of
    shape (out,). Returns (N, D_out) float32.
    bf16_act: only enable on v6e/v7x (v5e has no bf16 VPU/EUP path).
    """
    N, D_in = x.shape
    H = params["w1"].shape[0]
    D_out = params["w5"].shape[0]

    # --- tile sizing --------------------------------------------------------
    # Always a multiple of 128 (lane width) and >= 128 -> lane-dense stores.
    tile_n = max(128, (int(tile_n) // 128) * 128)
    n_pad128 = pl.cdiv(N, 128) * 128
    if n_pad128 >= 256:
        # Keep >= 2 grid steps so the "parallel" axis can shard across the two
        # v7x TensorCores (no effect on v5e/v6e, which have 1 TC).
        tile_n = min(tile_n, pl.cdiv(n_pad128 // 2, 128) * 128)
    else:
        tile_n = 128
    n_pad = pl.cdiv(N, tile_n) * tile_n
    grid_n = n_pad // tile_n

    # --- wrapper-side layout plumbing: batch -> lane axis, pad to tile grid --
    xt = jnp.pad(x.astype(jnp.float32).T, ((0, 0), (0, n_pad - N)))

    w_dtype = jnp.bfloat16 if bf16_act else jnp.float32
    w1 = params["w1"].astype(jnp.float32)              # used on the VPU / f32
    w2 = params["w2"].astype(w_dtype)
    w3 = params["w3"].astype(w_dtype)
    w4 = params["w4"].astype(w_dtype)
    w5t = params["w5"].astype(jnp.float32).T           # (H, D_out)
    b1, b2, b3, b4, b5 = (params[k].astype(jnp.float32).reshape(-1, 1)
                          for k in ("b1", "b2", "b3", "b4", "b5"))

    vpu_first = D_in <= 8                              # K too small for MXU
    vpu_last = D_out == 1                              # M too small for MXU

    def col_tile(feat):                                # tiled over the batch
        return pl.BlockSpec((feat, tile_n), lambda i: (0, i))

    def resident(a):                                   # DMA'd once, stays VMEM
        return pl.BlockSpec(a.shape, lambda i: (0, 0))

    in_specs = [col_tile(D_in),
                resident(w1), resident(b1),
                resident(w2), resident(b2),
                resident(w3), resident(b3),
                resident(w4), resident(b4),
                resident(w5t), resident(b5)]
    out_specs = col_tile(D_out)

    flops = 2 * n_pad * (D_in * H + 3 * H * H + H * D_out)
    transcendentals = 4 * n_pad * H
    param_bytes = sum(int(np.prod(a.shape)) * a.dtype.itemsize
                      for a in (w1, b1, w2, b2, w3, b3, w4, b4, w5t, b5))
    bytes_accessed = n_pad * (D_in + D_out) * 4 + param_bytes

    yt = pl.pallas_call(
        functools.partial(_mlp_kernel, bf16_act=bf16_act,
                          vpu_first=vpu_first, vpu_last=vpu_last),
        out_shape=jax.ShapeDtypeStruct((D_out, n_pad), jnp.float32),
        grid_spec=pltpu.PrefetchScalarGridSpec(
            num_scalar_prefetch=0,
            grid=(grid_n,),
            in_specs=in_specs,
            out_specs=out_specs),
        compiler_params=pltpu.CompilerParams(
            dimension_semantics=("parallel",),
            vmem_limit_bytes=32 * 1024 * 1024),
        cost_estimate=pl.CostEstimate(
            flops=flops,
            transcendentals=transcendentals,
            bytes_accessed=bytes_accessed),
    )(xt, w1, b1, w2, b2, w3, b3, w4, b4, w5t, b5)

    return yt[:, :N].T                                 # (N, D_out)


def init_params(key, D_in, H, D_out):
    """Deterministic init mirroring the PyTorch module (weights (out,in), bias (out,))."""
    ks = jax.random.split(key, 10)

    def w(k, fan_out, fan_in, std):
        return jax.random.normal(k, (fan_out, fan_in), jnp.float32) * std

    def b(k, fan_out):
        return jax.random.normal(k, (fan_out,), jnp.float32)

    return {
        "w1": w(ks[0], H, D_in, np.sqrt(2.0 / (D_in + H))), "b1": b(ks[1], H),
        "w2": w(ks[2], H, H, np.sqrt(2.0 / (H + H))),       "b2": b(ks[3], H),
        "w3": w(ks[4], H, H, np.sqrt(2.0 / (H + H))),       "b3": b(ks[5], H),
        "w4": w(ks[6], H, H, np.sqrt(2.0 / (H + H))),       "b4": b(ks[7], H),
        "w5": w(ks[8], D_out, H, np.sqrt(2.0 / (H + D_out))), "b5": b(ks[9], D_out),
    }


def _reference(x, p):
    y = jnp.tanh(x @ p["w1"].T + p["b1"])
    y = jnp.tanh(y @ p["w2"].T + p["b2"])
    y = jnp.tanh(y @ p["w3"].T + p["b3"])
    y = jnp.tanh(y @ p["w4"].T + p["b4"])
    return y @ p["w5"].T + p["b5"]


if __name__ == "__main__":
    # Small shapes consistent with the PINN use-case: 2-D collocation points.
    N, D_in, H, D_out = 500, 2, 32, 1

    key = jax.random.PRNGKey(0)
    k_x, k_p = jax.random.split(key)
    x = jax.random.normal(k_x, (N, D_in), jnp.float32)
    params = init_params(k_p, D_in, H, D_out)

    # Default tile_n is clamped to 256 here (padded N=512, >=2 grid steps),
    # so the demo exercises a multi-step "parallel" grid.
    out = general_forward(x, params, bf16_act=False)
    out = jax.block_until_ready(out)

    ref = _reference(x, params)
    np.testing.assert_allclose(np.asarray(out), np.asarray(ref),
                               rtol=1e-5, atol=1e-5)
    print("KERNEL_OK")
</pallas_src>

<mosaic_0001>
module attributes {stable_mosaic.version = 11 : i64} {
  func.func @_mlp_kernel(%arg0: i32, %arg1: memref<2x256xf32, #tpu.memory_space<vmem>>, %arg2: memref<32x2xf32, #tpu.memory_space<vmem>>, %arg3: memref<32x1xf32, #tpu.memory_space<vmem>>, %arg4: memref<32x32xf32, #tpu.memory_space<vmem>>, %arg5: memref<32x1xf32, #tpu.memory_space<vmem>>, %arg6: memref<32x32xf32, #tpu.memory_space<vmem>>, %arg7: memref<32x1xf32, #tpu.memory_space<vmem>>, %arg8: memref<32x32xf32, #tpu.memory_space<vmem>>, %arg9: memref<32x1xf32, #tpu.memory_space<vmem>>, %arg10: memref<32x1xf32, #tpu.memory_space<vmem>>, %arg11: memref<1x1xf32, #tpu.memory_space<vmem>>, %arg12: memref<1x256xf32, #tpu.memory_space<vmem>>) attributes {dimension_semantics = [#tpu.dimension_semantics<parallel>], iteration_bounds = array<i64: 2>, scalar_prefetch = 0 : i64, scratch_operands = 0 : i64, tpu.core_type = #tpu.core_type<tc>, window_params = [{transform_indices = @transform_0, window_bounds = array<i64: 2, 256>}, {pipeline_mode = #tpu.pipeline_mode<synchronous>, transform_indices = @transform_1, window_bounds = array<i64: 32, 2>}, {pipeline_mode = #tpu.pipeline_mode<synchronous>, transform_indices = @transform_2, window_bounds = array<i64: 32, 1>}, {pipeline_mode = #tpu.pipeline_mode<synchronous>, transform_indices = @transform_3, window_bounds = array<i64: 32, 32>}, {pipeline_mode = #tpu.pipeline_mode<synchronous>, transform_indices = @transform_4, window_bounds = array<i64: 32, 1>}, {pipeline_mode = #tpu.pipeline_mode<synchronous>, transform_indices = @transform_5, window_bounds = array<i64: 32, 32>}, {pipeline_mode = #tpu.pipeline_mode<synchronous>, transform_indices = @transform_6, window_bounds = array<i64: 32, 1>}, {pipeline_mode = #tpu.pipeline_mode<synchronous>, transform_indices = @transform_7, window_bounds = array<i64: 32, 32>}, {pipeline_mode = #tpu.pipeline_mode<synchronous>, transform_indices = @transform_8, window_bounds = array<i64: 32, 1>}, {pipeline_mode = #tpu.pipeline_mode<synchronous>, transform_indices = @transform_9, window_bounds = array<i64: 32, 1>}, {pipeline_mode = #tpu.pipeline_mode<synchronous>, transform_indices = @transform_10, window_bounds = array<i64: 1, 1>}, {transform_indices = @transform_11, window_bounds = array<i64: 1, 256>}]} {
    %c0 = arith.constant 0 : index
    %c0_0 = arith.constant 0 : index
    %0 = vector.load %arg1[%c0, %c0_0] : memref<2x256xf32, #tpu.memory_space<vmem>>, vector<2x256xf32>
    %c0_1 = arith.constant 0 : index
    %c0_2 = arith.constant 0 : index
    %1 = vector.load %arg2[%c0_1, %c0_2] : memref<32x2xf32, #tpu.memory_space<vmem>>, vector<32x2xf32>
    %2 = vector.extract_strided_slice %1 {offsets = [0, 0], sizes = [32, 1], strides = [1, 1]} : vector<32x2xf32> to vector<32x1xf32>
    %3 = vector.extract_strided_slice %0 {offsets = [0, 0], sizes = [1, 256], strides = [1, 1]} : vector<2x256xf32> to vector<1x256xf32>
    %4 = vector.broadcast %2 : vector<32x1xf32> to vector<32x256xf32>
    %5 = vector.broadcast %3 : vector<1x256xf32> to vector<32x256xf32>
    %6 = arith.mulf %4, %5 : vector<32x256xf32>
    %7 = vector.extract_strided_slice %1 {offsets = [0, 1], sizes = [32, 1], strides = [1, 1]} : vector<32x2xf32> to vector<32x1xf32>
    %8 = vector.extract_strided_slice %0 {offsets = [1, 0], sizes = [1, 256], strides = [1, 1]} : vector<2x256xf32> to vector<1x256xf32>
    %9 = vector.broadcast %7 : vector<32x1xf32> to vector<32x256xf32>
    %10 = vector.broadcast %8 : vector<1x256xf32> to vector<32x256xf32>
    %11 = arith.mulf %9, %10 : vector<32x256xf32>
    %12 = arith.addf %6, %11 : vector<32x256xf32>
    %c0_3 = arith.constant 0 : index
    %c0_4 = arith.constant 0 : index
    %13 = vector.load %arg3[%c0_3, %c0_4] : memref<32x1xf32, #tpu.memory_space<vmem>>, vector<32x1xf32>
    %14 = vector.broadcast %13 : vector<32x1xf32> to vector<32x256xf32>
    %15 = arith.addf %12, %14 : vector<32x256xf32>
    %16 = math.tanh %15 : vector<32x256xf32>
    %c0_5 = arith.constant 0 : index
    %c0_6 = arith.constant 0 : index
    %17 = vector.load %arg4[%c0_5, %c0_6] : memref<32x32xf32, #tpu.memory_space<vmem>>, vector<32x32xf32>
    %cst = arith.constant dense<0.000000e+00> : vector<32x256xf32>
    %18 = tpu.matmul %17, %16, %cst {dimension_numbers = #tpu.dot_dimension_numbers<[1], [0], [0], [1], [0, 0, 1, 1], [], []>} : vector<32x32xf32>, vector<32x256xf32>, vector<32x256xf32> -> vector<32x256xf32>
    %c0_7 = arith.constant 0 : index
    %c0_8 = arith.constant 0 : index
    %19 = vector.load %arg5[%c0_7, %c0_8] : memref<32x1xf32, #tpu.memory_space<vmem>>, vector<32x1xf32>
    %20 = vector.broadcast %19 : vector<32x1xf32> to vector<32x256xf32>
    %21 = arith.addf %18, %20 : vector<32x256xf32>
    %22 = math.tanh %21 : vector<32x256xf32>
    %c0_9 = arith.constant 0 : index
    %c0_10 = arith.constant 0 : index
    %23 = vector.load %arg6[%c0_9, %c0_10] : memref<32x32xf32, #tpu.memory_space<vmem>>, vector<32x32xf32>
    %cst_11 = arith.constant dense<0.000000e+00> : vector<32x256xf32>
    %24 = tpu.matmul %23, %22, %cst_11 {dimension_numbers = #tpu.dot_dimension_numbers<[1], [0], [0], [1], [0, 0, 1, 1], [], []>} : vector<32x32xf32>, vector<32x256xf32>, vector<32x256xf32> -> vector<32x256xf32>
    %c0_12 = arith.constant 0 : index
    %c0_13 = arith.constant 0 : index
    %25 = vector.load %arg7[%c0_12, %c0_13] : memref<32x1xf32, #tpu.memory_space<vmem>>, vector<32x1xf32>
    %26 = vector.broadcast %25 : vector<32x1xf32> to vector<32x256xf32>
    %27 = arith.addf %24, %26 : vector<32x256xf32>
    %28 = math.tanh %27 : vector<32x256xf32>
    %c0_14 = arith.constant 0 : index
    %c0_15 = arith.constant 0 : index
    %29 = vector.load %arg8[%c0_14, %c0_15] : memref<32x32xf32, #tpu.memory_space<vmem>>, vector<32x32xf32>
    %cst_16 = arith.constant dense<0.000000e+00> : vector<32x256xf32>
    %30 = tpu.matmul %29, %28, %cst_16 {dimension_numbers = #tpu.dot_dimension_numbers<[1], [0], [0], [1], [0, 0, 1, 1], [], []>} : vector<32x32xf32>, vector<32x256xf32>, vector<32x256xf32> -> vector<32x256xf32>
    %c0_17 = arith.constant 0 : index
    %c0_18 = arith.constant 0 : index
    %31 = vector.load %arg9[%c0_17, %c0_18] : memref<32x1xf32, #tpu.memory_space<vmem>>, vector<32x1xf32>
    %32 = vector.broadcast %31 : vector<32x1xf32> to vector<32x256xf32>
    %33 = arith.addf %30, %32 : vector<32x256xf32>
    %34 = math.tanh %33 : vector<32x256xf32>
    %c0_19 = arith.constant 0 : index
    %c0_20 = arith.constant 0 : index
    %35 = vector.load %arg10[%c0_19, %c0_20] : memref<32x1xf32, #tpu.memory_space<vmem>>, vector<32x1xf32>
    %36 = vector.broadcast %35 : vector<32x1xf32> to vector<32x256xf32>
    %37 = arith.mulf %36, %34 : vector<32x256xf32>
    %cst_21 = arith.constant dense<0.000000e+00> : vector<256xf32>
    %38 = vector.multi_reduction <add>, %37, %cst_21 [0] : vector<32x256xf32> to vector<256xf32>
    %39 = vector.shape_cast %38 : vector<256xf32> to vector<1x256xf32>
    %c0_22 = arith.constant 0 : index
    %c0_23 = arith.constant 0 : index
    %40 = vector.load %arg11[%c0_22, %c0_23] : memref<1x1xf32, #tpu.memory_space<vmem>>, vector<1x1xf32>
    %41 = vector.broadcast %40 : vector<1x1xf32> to vector<1x256xf32>
    %42 = arith.addf %39, %41 : vector<1x256xf32>
    %c0_24 = arith.constant 0 : index
    %c0_25 = arith.constant 0 : index
    %43 = vector.load %arg12[%c0_24, %c0_25] : memref<1x256xf32, #tpu.memory_space<vmem>>, vector<1x256xf32>
    tpu.vector_store %arg12[%c0_24, %c0_25], %42 {strides = array<i32>} : memref<1x256xf32, #tpu.memory_space<vmem>>, vector<1x256xf32>,
    return
  }
  func.func @transform_0(%arg0: i32) -> (i32, i32) {
    %c0_i32 = arith.constant 0 : i32
    %c0_i32_0 = arith.constant 0 : i32
    return %c0_i32, %arg0 : i32, i32
  }
  func.func @transform_1(%arg0: i32) -> (i32, i32) {
    %c0_i32 = arith.constant 0 : i32
    %c0_i32_0 = arith.constant 0 : i32
    %c0_i32_1 = arith.constant 0 : i32
    return %c0_i32, %c0_i32_0 : i32, i32
  }
  func.func @transform_2(%arg0: i32) -> (i32, i32) {
    %c0_i32 = arith.constant 0 : i32
    %c0_i32_0 = arith.constant 0 : i32
    %c0_i32_1 = arith.constant 0 : i32
    return %c0_i32, %c0_i32_0 : i32, i32
  }
  func.func @transform_3(%arg0: i32) -> (i32, i32) {
    %c0_i32 = arith.constant 0 : i32
    %c0_i32_0 = arith.constant 0 : i32
    %c0_i32_1 = arith.constant 0 : i32
    return %c0_i32, %c0_i32_0 : i32, i32
  }
  func.func @transform_4(%arg0: i32) -> (i32, i32) {
    %c0_i32 = arith.constant 0 : i32
    %c0_i32_0 = arith.constant 0 : i32
    %c0_i32_1 = arith.constant 0 : i32
    return %c0_i32, %c0_i32_0 : i32, i32
  }
  func.func @transform_5(%arg0: i32) -> (i32, i32) {
    %c0_i32 = arith.constant 0 : i32
    %c0_i32_0 = arith.constant 0 : i32
    %c0_i32_1 = arith.constant 0 : i32
    return %c0_i32, %c0_i32_0 : i32, i32
  }
  func.func @transform_6(%arg0: i32) -> (i32, i32) {
    %c0_i32 = arith.constant 0 : i32
    %c0_i32_0 = arith.constant 0 : i32
    %c0_i32_1 = arith.constant 0 : i32
    return %c0_i32, %c0_i32_0 : i32, i32
  }
  func.func @transform_7(%arg0: i32) -> (i32, i32) {
    %c0_i32 = arith.constant 0 : i32
    %c0_i32_0 = arith.constant 0 : i32
    %c0_i32_1 = arith.constant 0 : i32
    return %c0_i32, %c0_i32_0 : i32, i32
  }
  func.func @transform_8(%arg0: i32) -> (i32, i32) {
    %c0_i32 = arith.constant 0 : i32
    %c0_i32_0 = arith.constant 0 : i32
    %c0_i32_1 = arith.constant 0 : i32
    return %c0_i32, %c0_i32_0 : i32, i32
  }
  func.func @transform_9(%arg0: i32) -> (i32, i32) {
    %c0_i32 = arith.constant 0 : i32
    %c0_i32_0 = arith.constant 0 : i32
    %c0_i32_1 = arith.constant 0 : i32
    return %c0_i32, %c0_i32_0 : i32, i32
  }
  func.func @transform_10(%arg0: i32) -> (i32, i32) {
    %c0_i32 = arith.constant 0 : i32
    %c0_i32_0 = arith.constant 0 : i32
    %c0_i32_1 = arith.constant 0 : i32
    return %c0_i32, %c0_i32_0 : i32, i32
  }
  func.func @transform_11(%arg0: i32) -> (i32, i32) {
    %c0_i32 = arith.constant 0 : i32
    %c0_i32_0 = arith.constant 0 : i32
    return %c0_i32, %arg0 : i32, i32
  }
}

</mosaic_0001>

<llo_original>
// kernel: tpu_custom_call.1
$region0: #{tpu_custom_call.1}
  #allocation0 [shape = 'u32[]', space=smem, size = 0x4, offset = 0x4, fixed_abs, tag = 'smem constant byte address 0x4 - core index']
  #allocation1 [shape = 'u32[72,128]{1,0:T(1,128)}', space=vmem, size = 0x9000, scoped, tag = 'internal scratch']
  #allocation2 [shape = 'f32[1,1]{1,0:T(1,128)S(1)}', space=vmem, size = 0x200, scoped, tag = 'scoped memory for tpu_custom_call.1']
  %s0 = inlined_call_operand.vmem [shape: f32[2,512], index: 0, kind: input, shape index: {}]
  %s1 = inlined_call_operand.vmem [shape: f32[32,2], index: 1, kind: input, shape index: {}]
  %s2 = inlined_call_operand.vmem [shape: f32[32,1], index: 2, kind: input, shape index: {}]
  %s3 = inlined_call_operand.vmem [shape: f32[32,32], index: 3, kind: input, shape index: {}]
  %s4 = inlined_call_operand.vmem [shape: f32[32,1], index: 4, kind: input, shape index: {}]
  %s5 = inlined_call_operand.vmem [shape: f32[32,32], index: 5, kind: input, shape index: {}]
  %s6 = inlined_call_operand.vmem [shape: f32[32,1], index: 6, kind: input, shape index: {}]
  %s7 = inlined_call_operand.vmem [shape: f32[32,32], index: 7, kind: input, shape index: {}]
  %s8 = inlined_call_operand.vmem [shape: f32[32,1], index: 8, kind: input, shape index: {}]
  %s9 = inlined_call_operand.vmem [shape: f32[32,1], index: 9, kind: input, shape index: {}]
  %s10 = inlined_call_operand.<no memory space> [shape: f32[1,1], index: 10, kind: input, shape index: {}]
  %s11 = inlined_call_operand.hbm [shape: f32[1,512], index: 11, kind: output, shape index: {}]
  %s12 = sld [smem:[#allocation0]]
  $region77: #{tpu_custom_call.1} parent=0
    _
  %s14 = ssub.s32 1, %s12
  %s15 = scalar_select 0, %s14, %s12
  %v16 = vstv %s10
  %17 = vst [vmem:[#allocation2] sm:$0x1] %v16
  $region1: #{tpu_custom_call.1} parent=0
    #allocation3 [shape = 'u8[2048]{0}', space=vmem, size = 0x800, scoped, tag = 'output window, operand 0']
    #allocation4 [shape = 's32[2]{0}', space=sflag, size = 0x8, scoped, tag = 'scoped memory for tpu_custom_call.1']
    %18 = vsyncpa [#allocation4], 0
    %s19 = scalar_lea.sflag [#allocation4], 1
    %20 = vsyncpa %s19, 0
    loop: start=0, step=1, limit=4
    $region2: #{tpu_custom_call.1} parent=1 // loop_pre_header
      _
    $region3: #{tpu_custom_call.1} parent=1 // loop_header
      %s22 = sphi 0, %s26
      %p23 = scmp.ge.s32.totalorder %s22, 4
      %s32 = sphi 0, %s34
      %s35 = sphi 0, %s32
      %s36 = sphi 0, %s35
      %s52 = sphi 0, %s36
      %s56 = sphi 0, %s56
      %s58 = sphi 0, %s56
      %s59 = sphi 0, %s58
      %s73 = sphi 0, %s59
      %s77 = sphi 0, %s77
      %s79 = sphi 0, %s77
      %s80 = sphi 0, %s79
      %s94 = sphi 0, %s80
      %s98 = sphi 0, %s98
      %s100 = sphi 0, %s98
      %s101 = sphi 0, %s100
      %s115 = sphi 0, %s101
      %s119 = sphi 0, %s119
      %s121 = sphi 0, %s119
      %s122 = sphi 0, %s121
      %s136 = sphi 0, %s122
      %s140 = sphi 0, %s140
      %s142 = sphi 0, %s140
      %s143 = sphi 0, %s142
      %s157 = sphi 0, %s143
      %s161 = sphi 0, %s161
      %s163 = sphi 0, %s161
      %s164 = sphi 0, %s163
      %s178 = sphi 0, %s164
      %s182 = sphi 0, %s182
      %s184 = sphi 0, %s182
      %s185 = sphi 0, %s184
      %s199 = sphi 0, %s185
      %s203 = sphi 0, %s203
      %s205 = sphi 0, %s203
      %s206 = sphi 0, %s205
      %s220 = sphi 0, %s206
      %s224 = sphi 0, %s224
      %s226 = sphi 0, %s224
      %s227 = sphi 0, %s226
      %s241 = sphi 0, %s227
      %s245 = sphi 0, %s245
      %s247 = sphi 0, %s245
      %s248 = sphi 0, %s247
      %s262 = sphi 0, %s248
      %s268 = sphi 0, %s270
      %s271 = sphi 0, %s268
      %s272 = sphi 0, %s271
      %s288 = sphi 0, %s272
    $region4: #{tpu_custom_call.1} parent=1 // loop_header_branch
      %25 = sbr.rel (%p23) target = $region8
    $region5: #{tpu_custom_call.1} parent=1 // loop_body
      %s27 = ssub.s32 %s22, 1
      %s28 = ssub.s32 %s22, 2
      %s29 = sadd.s32 %s22, 1
      %s30 = ssub.s32 %s22, %s29
      %p31 = scmp.eq.s32.totalorder %s30, 0
      %s33 = sadd.s32 %s32, 1
      %s34 = scalar_select %p31, %s32, %s33
      %p37 = pneg %p31
      %p38 = scmp.eq.s32.totalorder %s22, 1
      %p39 = por %p37, %p38
      %p40 = scmp.ne.s32.totalorder %s32, %s35
      %p41 = scmp.eq.s32.totalorder %s22, 0
      %p42 = por %p40, %p41
      %p43 = scmp.ne.s32.totalorder %s32, %s35
      %p44 = scmp.eq.s32.totalorder %s27, 1
      %p45 = por %p43, %p44
      %p46 = scmp.ne.s32.totalorder %s35, %s36
      %p47 = scmp.eq.s32.totalorder %s27, 0
      %p48 = por %p46, %p47
      %p49 = scmp.ne.s32.totalorder %s35, %s36
      %p50 = scmp.eq.s32.totalorder %s28, 1
      %p51 = por %p49, %p50
      %p53 = scmp.ne.s32.totalorder %s36, %s52
      %p54 = scmp.eq.s32.totalorder %s28, 0
      %p55 = por %p53, %p54
      %s57 = sadd.s32 %s56, 1
      %p60 = scmp.eq.s32.totalorder %s22, 1
      %p61 = scmp.ne.s32.totalorder %s56, %s58
      %p62 = scmp.eq.s32.totalorder %s22, 0
      %p63 = por %p61, %p62
      %p64 = scmp.ne.s32.totalorder %s56, %s58
      %p65 = scmp.eq.s32.totalorder %s27, 1
      %p66 = por %p64, %p65
      %p67 = scmp.ne.s32.totalorder %s58, %s59
      %p68 = scmp.eq.s32.totalorder %s27, 0
      %p69 = por %p67, %p68
      %p70 = scmp.ne.s32.totalorder %s58, %s59
      %p71 = scmp.eq.s32.totalorder %s28, 1
      %p72 = por %p70, %p71
      %p74 = scmp.ne.s32.totalorder %s59, %s73
      %p75 = scmp.eq.s32.totalorder %s28, 0
      %p76 = por %p74, %p75
      %s78 = sadd.s32 %s77, 1
      %p81 = scmp.eq.s32.totalorder %s22, 1
      %p82 = scmp.ne.s32.totalorder %s77, %s79
      %p83 = scmp.eq.s32.totalorder %s22, 0
      %p84 = por %p82, %p83
      %p85 = scmp.ne.s32.totalorder %s77, %s79
      %p86 = scmp.eq.s32.totalorder %s27, 1
      %p87 = por %p85, %p86
      %p88 = scmp.ne.s32.totalorder %s79, %s80
      %p89 = scmp.eq.s32.totalorder %s27, 0
      %p90 = por %p88, %p89
      %p91 = scmp.ne.s32.totalorder %s79, %s80
      %p92 = scmp.eq.s32.totalorder %s28, 1
      %p93 = por %p91, %p92
      %p95 = scmp.ne.s32.totalorder %s80, %s94
      %p96 = scmp.eq.s32.totalorder %s28, 0
      %p97 = por %p95, %p96
      %s99 = sadd.s32 %s98, 1
      %p102 = scmp.eq.s32.totalorder %s22, 1
      %p103 = scmp.ne.s32.totalorder %s98, %s100
      %p104 = scmp.eq.s32.totalorder %s22, 0
      %p105 = por %p103, %p104
      %p106 = scmp.ne.s32.totalorder %s98, %s100
      %p107 = scmp.eq.s32.totalorder %s27, 1
      %p108 = por %p106, %p107
      %p109 = scmp.ne.s32.totalorder %s100, %s101
      %p110 = scmp.eq.s32.totalorder %s27, 0
      %p111 = por %p109, %p110
      %p112 = scmp.ne.s32.totalorder %s100, %s101
      %p113 = scmp.eq.s32.totalorder %s28, 1
      %p114 = por %p112, %p113
      %p116 = scmp.ne.s32.totalorder %s101, %s115
      %p117 = scmp.eq.s32.totalorder %s28, 0
      %p118 = por %p116, %p117
      %s120 = sadd.s32 %s119, 1
      %p123 = scmp.eq.s32.totalorder %s22, 1
      %p124 = scmp.ne.s32.totalorder %s119, %s121
      %p125 = scmp.eq.s32.totalorder %s22, 0
      %p126 = por %p124, %p125
      %p127 = scmp.ne.s32.totalorder %s119, %s121
      %p128 = scmp.eq.s32.totalorder %s27, 1
      %p129 = por %p127, %p128
      %p130 = scmp.ne.s32.totalorder %s121, %s122
      %p131 = scmp.eq.s32.totalorder %s27, 0
      %p132 = por %p130, %p131
      %p133 = scmp.ne.s32.totalorder %s121, %s122
      %p134 = scmp.eq.s32.totalorder %s28, 1
      %p135 = por %p133, %p134
      %p137 = scmp.ne.s32.totalorder %s122, %s136
      %p138 = scmp.eq.s32.totalorder %s28, 0
      %p139 = por %p137, %p138
      %s141 = sadd.s32 %s140, 1
      %p144 = scmp.eq.s32.totalorder %s22, 1
      %p145 = scmp.ne.s32.totalorder %s140, %s142
      %p146 = scmp.eq.s32.totalorder %s22, 0
      %p147 = por %p145, %p146
      %p148 = scmp.ne.s32.totalorder %s140, %s142
      %p149 = scmp.eq.s32.totalorder %s27, 1
      %p150 = por %p148, %p149
      %p151 = scmp.ne.s32.totalorder %s142, %s143
      %p152 = scmp.eq.s32.totalorder %s27, 0
      %p153 = por %p151, %p152
      %p154 = scmp.ne.s32.totalorder %s142, %s143
      %p155 = scmp.eq.s32.totalorder %s28, 1
      %p156 = por %p154, %p155
      %p158 = scmp.ne.s32.totalorder %s143, %s157
      %p159 = scmp.eq.s32.totalorder %s28, 0
      %p160 = por %p158, %p159
      %s162 = sadd.s32 %s161, 1
      %p165 = scmp.eq.s32.totalorder %s22, 1
      %p166 = scmp.ne.s32.totalorder %s161, %s163
      %p167 = scmp.eq.s32.totalorder %s22, 0
      %p168 = por %p166, %p167
      %p169 = scmp.ne.s32.totalorder %s161, %s163
      %p170 = scmp.eq.s32.totalorder %s27, 1
      %p171 = por %p169, %p170
      %p172 = scmp.ne.s32.totalorder %s163, %s164
      %p173 = scmp.eq.s32.totalorder %s27, 0
      %p174 = por %p172, %p173
      %p175 = scmp.ne.s32.totalorder %s163, %s164
      %p176 = scmp.eq.s32.totalorder %s28, 1
      %p177 = por %p175, %p176
      %p179 = scmp.ne.s32.totalorder %s164, %s178
      %p180 = scmp.eq.s32.totalorder %s28, 0
      %p181 = por %p179, %p180
      %s183 = sadd.s32 %s182, 1
      %p186 = scmp.eq.s32.totalorder %s22, 1
      %p187 = scmp.ne.s32.totalorder %s182, %s184
      %p188 = scmp.eq.s32.totalorder %s22, 0
      %p189 = por %p187, %p188
      %p190 = scmp.ne.s32.totalorder %s182, %s184
      %p191 = scmp.eq.s32.totalorder %s27, 1
      %p192 = por %p190, %p191
      %p193 = scmp.ne.s32.totalorder %s184, %s185
      %p194 = scmp.eq.s32.totalorder %s27, 0
      %p195 = por %p193, %p194
      %p196 = scmp.ne.s32.totalorder %s184, %s185
      %p197 = scmp.eq.s32.totalorder %s28, 1
      %p198 = por %p196, %p197
      %p200 = scmp.ne.s32.totalorder %s185, %s199
      %p201 = scmp.eq.s32.totalorder %s28, 0
      %p202 = por %p200, %p201
      %s204 = sadd.s32 %s203, 1
      %p207 = scmp.eq.s32.totalorder %s22, 1
      %p208 = scmp.ne.s32.totalorder %s203, %s205
      %p209 = scmp.eq.s32.totalorder %s22, 0
      %p210 = por %p208, %p209
      %p211 = scmp.ne.s32.totalorder %s203, %s205
      %p212 = scmp.eq.s32.totalorder %s27, 1
      %p213 = por %p211, %p212
      %p214 = scmp.ne.s32.totalorder %s205, %s206
      %p215 = scmp.eq.s32.totalorder %s27, 0
      %p216 = por %p214, %p215
      %p217 = scmp.ne.s32.totalorder %s205, %s206
      %p218 = scmp.eq.s32.totalorder %s28, 1
      %p219 = por %p217, %p218
      %p221 = scmp.ne.s32.totalorder %s206, %s220
      %p222 = scmp.eq.s32.totalorder %s28, 0
      %p223 = por %p221, %p222
      %s225 = sadd.s32 %s224, 1
      %p228 = scmp.eq.s32.totalorder %s22, 1
      %p229 = scmp.ne.s32.totalorder %s224, %s226
      %p230 = scmp.eq.s32.totalorder %s22, 0
      %p231 = por %p229, %p230
      %p232 = scmp.ne.s32.totalorder %s224, %s226
      %p233 = scmp.eq.s32.totalorder %s27, 1
      %p234 = por %p232, %p233
      %p235 = scmp.ne.s32.totalorder %s226, %s227
      %p236 = scmp.eq.s32.totalorder %s27, 0
      %p237 = por %p235, %p236
      %p238 = scmp.ne.s32.totalorder %s226, %s227
      %p239 = scmp.eq.s32.totalorder %s28, 1
      %p240 = por %p238, %p239
      %p242 = scmp.ne.s32.totalorder %s227, %s241
      %p243 = scmp.eq.s32.totalorder %s28, 0
      %p244 = por %p242, %p243
      %s246 = sadd.s32 %s245, 1
      %p249 = scmp.eq.s32.totalorder %s22, 1
      %p250 = scmp.ne.s32.totalorder %s245, %s247
      %p251 = scmp.eq.s32.totalorder %s22, 0
      %p252 = por %p250, %p251
      %p253 = scmp.ne.s32.totalorder %s245, %s247
      %p254 = scmp.eq.s32.totalorder %s27, 1
      %p255 = por %p253, %p254
      %p256 = scmp.ne.s32.totalorder %s247, %s248
      %p257 = scmp.eq.s32.totalorder %s27, 0
      %p258 = por %p256, %p257
      %p259 = scmp.ne.s32.totalorder %s247, %s248
      %p260 = scmp.eq.s32.totalorder %s28, 1
      %p261 = por %p259, %p260
      %p263 = scmp.ne.s32.totalorder %s248, %s262
      %p264 = scmp.eq.s32.totalorder %s28, 0
      %p265 = por %p263, %p264
      %s266 = ssub.s32 %s22, %s29
      %p267 = scmp.eq.s32.totalorder %s266, 0
      %s269 = sadd.s32 %s268, 1
      %s270 = scalar_select %p267, %s268, %s269
      %p273 = pneg %p267
      %p274 = scmp.eq.s32.totalorder %s22, 1
      %p275 = por %p273, %p274
      %p276 = scmp.ne.s32.totalorder %s268, %s271
      %p277 = scmp.eq.s32.totalorder %s22, 0
      %p278 = por %p276, %p277
      %p279 = scmp.ne.s32.totalorder %s268, %s271
      %p280 = scmp.eq.s32.totalorder %s27, 1
      %p281 = por %p279, %p280
      %p282 = scmp.ne.s32.totalorder %s271, %s272
      %p283 = scmp.eq.s32.totalorder %s27, 0
      %p284 = por %p282, %p283
      %p285 = scmp.ne.s32.totalorder %s271, %s272
      %p286 = scmp.eq.s32.totalorder %s28, 1
      %p287 = por %p285, %p286
      %p289 = scmp.ne.s32.totalorder %s272, %s288
      %p290 = scmp.eq.s32.totalorder %s28, 0
      %p291 = por %p289, %p290
      %p292 = scmp.le.s32.totalorder 1, %s22
      %p293 = scmp.lt.s32.totalorder %s22, 3
      %p294 = pnand %p292, %p293
      %p295 = pneg %p294
      // Predicated region
      $region9: #{tpu_custom_call.1} parent=5 // pred_check
        _
      $region10: #{tpu_custom_call.1} parent=5 // pred_check_branch
        %297 = sbr.rel (%p294) target = $region12
      $region11: #{tpu_custom_call.1} parent=5 // pred_region
        %s298 = ssub.s32 %s22, 1
        // Predicated region
        $region13: #{tpu_custom_call.1} parent=11 // pred_check
          %p299 = pneg %p69
        $region14: #{tpu_custom_call.1} parent=11 // pred_check_branch
          %301 = sbr.rel (%p299) target = $region16
        $region15: #{tpu_custom_call.1} parent=11 // pred_region
          _
        $region16: #{tpu_custom_call.1} parent=11 // pred_fallthru
          _
        // Predicated region
        $region17: #{tpu_custom_call.1} parent=11 // pred_check
          %p302 = pneg %p90
        $region18: #{tpu_custom_call.1} parent=11 // pred_check_branch
          %304 = sbr.rel (%p302) target = $region20
        $region19: #{tpu_custom_call.1} parent=11 // pred_region
          _
        $region20: #{tpu_custom_call.1} parent=11 // pred_fallthru
          _
        // Predicated region
        $region21: #{tpu_custom_call.1} parent=11 // pred_check
          %p305 = pneg %p111
        $region22: #{tpu_custom_call.1} parent=11 // pred_check_branch
          %307 = sbr.rel (%p305) target = $region24
        $region23: #{tpu_custom_call.1} parent=11 // pred_region
          _
        $region24: #{tpu_custom_call.1} parent=11 // pred_fallthru
          _
        // Predicated region
        $region25: #{tpu_custom_call.1} parent=11 // pred_check
          %p308 = pneg %p132
        $region26: #{tpu_custom_call.1} parent=11 // pred_check_branch
          %310 = sbr.rel (%p308) target = $region28
        $region27: #{tpu_custom_call.1} parent=11 // pred_region
          _
        $region28: #{tpu_custom_call.1} parent=11 // pred_fallthru
          _
        // Predicated region
        $region29: #{tpu_custom_call.1} parent=11 // pred_check
          %p311 = pneg %p153
        $region30: #{tpu_custom_call.1} parent=11 // pred_check_branch
          %313 = sbr.rel (%p311) target = $region32
        $region31: #{tpu_custom_call.1} parent=11 // pred_region
          _
        $region32: #{tpu_custom_call.1} parent=11 // pred_fallthru
          _
        // Predicated region
        $region33: #{tpu_custom_call.1} parent=11 // pred_check
          %p314 = pneg %p174
        $region34: #{tpu_custom_call.1} parent=11 // pred_check_branch
          %316 = sbr.rel (%p314) target = $region36
        $region35: #{tpu_custom_call.1} parent=11 // pred_region
          _
        $region36: #{tpu_custom_call.1} parent=11 // pred_fallthru
          _
        // Predicated region
        $region37: #{tpu_custom_call.1} parent=11 // pred_check
          %p317 = pneg %p195
        $region38: #{tpu_custom_call.1} parent=11 // pred_check_branch
          %319 = sbr.rel (%p317) target = $region40
        $region39: #{tpu_custom_call.1} parent=11 // pred_region
          _
        $region40: #{tpu_custom_call.1} parent=11 // pred_fallthru
          _
        // Predicated region
        $region41: #{tpu_custom_call.1} parent=11 // pred_check
          %p320 = pneg %p216
        $region42: #{tpu_custom_call.1} parent=11 // pred_check_branch
          %322 = sbr.rel (%p320) target = $region44
        $region43: #{tpu_custom_call.1} parent=11 // pred_region
          _
        $region44: #{tpu_custom_call.1} parent=11 // pred_fallthru
          _
        // Predicated region
        $region45: #{tpu_custom_call.1} parent=11 // pred_check
          %p323 = pneg %p237
        $region46: #{tpu_custom_call.1} parent=11 // pred_check_branch
          %325 = sbr.rel (%p323) target = $region48
        $region47: #{tpu_custom_call.1} parent=11 // pred_region
          _
        $region48: #{tpu_custom_call.1} parent=11 // pred_fallthru
          _
        // Predicated region
        $region49: #{tpu_custom_call.1} parent=11 // pred_check
          %p326 = pneg %p258
        $region50: #{tpu_custom_call.1} parent=11 // pred_check_branch
          %328 = sbr.rel (%p326) target = $region52
        $region51: #{tpu_custom_call.1} parent=11 // pred_region
          _
        $region52: #{tpu_custom_call.1} parent=11 // pred_fallthru
          _
      $region12: #{tpu_custom_call.1} parent=5 // pred_fallthru
        _
      %p329 = scmp.lt.s32.totalorder %s22, 2
      // Predicated region
      $region53: #{tpu_custom_call.1} parent=5 // pred_check
        %p330 = pneg %p329
      $region54: #{tpu_custom_call.1} parent=5 // pred_check_branch
        %332 = sbr.rel (%p330) target = $region56
      $region55: #{tpu_custom_call.1} parent=5 // pred_region
        // Predicated region
        $region57: #{tpu_custom_call.1} parent=55 // pred_check
          %p333 = pneg %p42
        $region58: #{tpu_custom_call.1} parent=55 // pred_check_branch
          %335 = sbr.rel (%p333) target = $region60
        $region59: #{tpu_custom_call.1} parent=55 // pred_region
          %s336 = smul.u32 2, %s22
          %p337 = scmp.lt.s32.totalorder %s336, 3
          %s338 = scalar_select %p337, %s336, 3
          %s339 = smul.addr %s338, 2
          %s340 = scalar_lea.vmem %s0, %s339
          %s341 = smul.u32 2, %s22
        $region60: #{tpu_custom_call.1} parent=55 // pred_fallthru
          _
      $region56: #{tpu_custom_call.1} parent=5 // pred_fallthru
        _
      %p342 = scmp.le.s32.totalorder 1, %s22
      %p343 = scmp.lt.s32.totalorder %s22, 3
      %p344 = pnand %p342, %p343
      %p345 = pneg %p344
      // Predicated region
      $region61: #{tpu_custom_call.1} parent=5 // pred_check
        _
      $region62: #{tpu_custom_call.1} parent=5 // pred_check_branch
        %347 = sbr.rel (%p344) target = $region64
      $region63: #{tpu_custom_call.1} parent=5 // pred_region
        %s348 = ssub.s32 %s22, 1
        %s349 = smul.u32 2, %s27
        %p350 = scmp.lt.s32.totalorder %s349, 3
        %s351 = scalar_select %p350, %s349, 3
        %s352 = smul.addr %s351, 2
        %s353 = scalar_lea.vmem %s0, %s352
        %p354 = pneg %p48
        %p355 = pneg %p45
        %p356 = pneg %p69
        %p357 = pneg %p66
        %p358 = pneg %p90
        %p359 = pneg %p87
        %p360 = pneg %p111
        %p361 = pneg %p108
        %p362 = pneg %p132
        %p363 = pneg %p129
        %p364 = pneg %p153
        %p365 = pneg %p150
        %p366 = pneg %p174
        %p367 = pneg %p171
        %p368 = pneg %p195
        %p369 = pneg %p192
        %p370 = pneg %p216
        %p371 = pneg %p213
        %p372 = pneg %p237
        %p373 = pneg %p234
        %p374 = pneg %p258
        %p375 = pneg %p255
        %p376 = pneg %p284
        %p377 = pneg %p281
        %s378 = sand.u32 %s271, 1
        %s379 = scalar_lea.sflag [#allocation4], %s378
        %s380 = sand.u32 %s271, 1
        %s381 = smul.addr %s380, 2
        %s382 = scalar_lea.vmem [#allocation3], %s381
        %s383 = smul.u32 2, %s27
        %p384 = scmp.lt.s32.totalorder %s383, 3
        %s385 = scalar_select %p384, %s383, 3
        %s386 = smul.addr %s385, 2
        %s387 = scalar_lea.vmem %s0, %s386
        %s388 = smul.u32 2, %s27
        %s389 = smul.u32 2, %s27
        %v390 = vld [vmem:[%s387] sm:$0xf]
        %v391 = vld [vmem:[%s1] sm:$0xff]
        %v392 = vld [vmem:[%s1 + $0x8] sm:$0xff]
        %v393 = vld [vmem:[%s1 + $0x10] sm:$0xff]
        %v394 = vld [vmem:[%s1 + $0x18] sm:$0xff]
        %396 = vset.pattern.permute.xlu0 0
        %397 = vperm.xlu0 %396, %v391
        %v398 = vpop.permute.xlu0 %397
        %401 = vset.pattern.permute.xlu0 0
        %402 = vperm.xlu0 %401, %v392
        %v403 = vpop.permute.xlu0 %402
        %406 = vset.pattern.permute.xlu0 0
        %407 = vperm.xlu0 %406, %v393
        %v408 = vpop.permute.xlu0 %407
        %411 = vset.pattern.permute.xlu0 0
        %412 = vperm.xlu0 %411, %v394
        %v413 = vpop.permute.xlu0 %412
        %v416 = vperm.slane %v390, 0
        %v417 = vperm.slane %v390, 2
        %v420 = vperm.slane %v416, 0
        %v421 = vperm.slane %v417, 0
        %v422 = vmul.f32 %v398, %v420
        %v423 = vmul.f32 %v398, %v421
        %v424 = vmul.f32 %v403, %v420
        %v425 = vmul.f32 %v403, %v421
        %v426 = vmul.f32 %v408, %v420
        %v427 = vmul.f32 %v408, %v421
        %v428 = vmul.f32 %v413, %v420
        %v429 = vmul.f32 %v413, %v421
        %430 = vset.pattern.permute.xlu0 1
        %431 = vperm.xlu0 %430, %v391
        %v432 = vpop.permute.xlu0 %431
        %434 = vset.pattern.permute.xlu0 1
        %435 = vperm.xlu0 %434, %v392
        %v436 = vpop.permute.xlu0 %435
        %438 = vset.pattern.permute.xlu0 1
        %439 = vperm.xlu0 %438, %v393
        %v440 = vpop.permute.xlu0 %439
        %442 = vset.pattern.permute.xlu0 1
        %443 = vperm.xlu0 %442, %v394
        %v444 = vpop.permute.xlu0 %443
        %v446 = vperm.slane %v390, 1
        %v447 = vperm.slane %v390, 3
        %v450 = vperm.slane %v446, 1
        %v451 = vperm.slane %v447, 1
        %v452 = vmul.f32 %v432, %v450
        %v453 = vmul.f32 %v432, %v451
        %v454 = vmul.f32 %v436, %v450
        %v455 = vmul.f32 %v436, %v451
        %v456 = vmul.f32 %v440, %v450
        %v457 = vmul.f32 %v440, %v451
        %v458 = vmul.f32 %v444, %v450
        %v459 = vmul.f32 %v444, %v451
        %v460 = vadd.f32 %v422, %v452
        %v461 = vadd.f32 %v423, %v453
        %v462 = vadd.f32 %v424, %v454
        %v463 = vadd.f32 %v425, %v455
        %v464 = vadd.f32 %v426, %v456
        %v465 = vadd.f32 %v427, %v457
        %v466 = vadd.f32 %v428, %v458
        %v467 = vadd.f32 %v429, %v459
        %v468 = vld [vmem:[%s2] sm:$0xff]
        %v469 = vld [vmem:[%s2 + $0x8] sm:$0xff]
        %v470 = vld [vmem:[%s2 + $0x10] sm:$0xff]
        %v471 = vld [vmem:[%s2 + $0x18] sm:$0xff]
        %473 = vset.pattern.permute.xlu0 0
        %474 = vperm.xlu0 %473, %v468
        %v475 = vpop.permute.xlu0 %474
        %478 = vset.pattern.permute.xlu0 0
        %479 = vperm.xlu0 %478, %v469
        %v480 = vpop.permute.xlu0 %479
        %483 = vset.pattern.permute.xlu0 0
        %484 = vperm.xlu0 %483, %v470
        %v485 = vpop.permute.xlu0 %484
        %488 = vset.pattern.permute.xlu0 0
        %489 = vperm.xlu0 %488, %v471
        %v490 = vpop.permute.xlu0 %489
        %v492 = vadd.f32 %v460, %v475
        %v493 = vadd.f32 %v461, %v475
        %v494 = vadd.f32 %v462, %v480
        %v495 = vadd.f32 %v463, %v480
        %v496 = vadd.f32 %v464, %v485
        %v497 = vadd.f32 %v465, %v485
        %v498 = vadd.f32 %v466, %v490
        %v499 = vadd.f32 %v467, %v490
        %v500 = vtanh.pop %v492
        %v501 = vtanh.pop %v493
        %v502 = vtanh.pop %v494
        %v503 = vtanh.pop %v495
        %v504 = vtanh.pop %v496
        %v505 = vtanh.pop %v497
        %v506 = vtanh.pop %v498
        %v507 = vtanh.pop %v499
        %v508 = vld [vmem:[%s3] sm:$0xff]
        %v509 = vld [vmem:[%s3 + $0x8] sm:$0xff]
        %v510 = vld [vmem:[%s3 + $0x10] sm:$0xff]
        %v511 = vld [vmem:[%s3 + $0x18] sm:$0xff]
        %v512 = vld [vmem:[%s4] sm:$0xff]
        %v513 = vld [vmem:[%s4 + $0x8] sm:$0xff]
        %v514 = vld [vmem:[%s4 + $0x10] sm:$0xff]
        %v515 = vld [vmem:[%s4 + $0x18] sm:$0xff]
        %517 = vset.pattern.permute.xlu0 0
        %518 = vperm.xlu0 %517, %v512
        %v519 = vpop.permute.xlu0 %518
        %522 = vset.pattern.permute.xlu0 0
        %523 = vperm.xlu0 %522, %v513
        %v524 = vpop.permute.xlu0 %523
        %527 = vset.pattern.permute.xlu0 0
        %528 = vperm.xlu0 %527, %v514
        %v529 = vpop.permute.xlu0 %528
        %532 = vset.pattern.permute.xlu0 0
        %533 = vperm.xlu0 %532, %v515
        %v534 = vpop.permute.xlu0 %533
        %vm536 = vcmask 261120
        %v538 = vsel %vm536, %v508, 0
        %v541 = vsel %vm536, %v509, 0
        %v544 = vsel %vm536, %v510, 0
        %v547 = vsel %vm536, %v511, 0
        %549 = vmatpush.msra.mxu0 0.0
        %550 = vmatpush.msra.mxu0 0.0
        %551 = vmatpush.msra.mxu0 0.0
        %552 = vmatpush.msra.mxu0 0.0
        %553 = vmatpush.msra.mxu0 0.0
        %554 = vmatpush.msra.mxu0 0.0
        %555 = vmatpush.msra.mxu0 0.0
        %556 = vmatpush.msra.mxu0 0.0
        %557 = vmatpush.msra.mxu0 0.0
        %558 = vmatpush.msra.mxu0 0.0
        %559 = vmatpush.msra.mxu0 0.0
        %560 = vmatpush.msra.mxu0 0.0
        %561 = vmatpush.msra.mxu0 %v506
        %562 = vmatpush.msra.mxu0 %v504
        %563 = vmatpush.msra.mxu0 %v502
        %564 = vmatpush.msra.mxu0 %v500
        %565 = vmatmul.f32.gmra.mxu0 %v538
        %v566 = vpop.f32.mrf.mxu0
        %v567 = vadd.f32 %v519, %v566
        %568 = vmatmul.f32.gmra.mxu0 %v541
        %v569 = vpop.f32.mrf.mxu0
        %v570 = vadd.f32 %v524, %v569
        %571 = vmatmul.f32.gmra.mxu0 %v544
        %v572 = vpop.f32.mrf.mxu0
        %v573 = vadd.f32 %v529, %v572
        %574 = vmatmul.f32.gmra.mxu0 %v547
        %v575 = vpop.f32.mrf.mxu0
        %v576 = vadd.f32 %v534, %v575
        %577 = vdwg.mxu0
        %578 = vmatpush.msra.mxu0 0.0
        %579 = vmatpush.msra.mxu0 0.0
        %580 = vmatpush.msra.mxu0 0.0
        %581 = vmatpush.msra.mxu0 0.0
        %582 = vmatpush.msra.mxu0 0.0
        %583 = vmatpush.msra.mxu0 0.0
        %584 = vmatpush.msra.mxu0 0.0
        %585 = vmatpush.msra.mxu0 0.0
        %586 = vmatpush.msra.mxu0 0.0
        %587 = vmatpush.msra.mxu0 0.0
        %588 = vmatpush.msra.mxu0 0.0
        %589 = vmatpush.msra.mxu0 0.0
        %590 = vmatpush.msra.mxu0 %v507
        %591 = vmatpush.msra.mxu0 %v505
        %592 = vmatpush.msra.mxu0 %v503
        %593 = vmatpush.msra.mxu0 %v501
        %594 = vmatmul.f32.gmra.mxu0 %v538
        %v595 = vpop.f32.mrf.mxu0
        %v596 = vadd.f32 %v519, %v595
        %597 = vmatmul.f32.gmra.mxu0 %v541
        %v598 = vpop.f32.mrf.mxu0
        %v599 = vadd.f32 %v524, %v598
        %600 = vmatmul.f32.gmra.mxu0 %v544
        %v601 = vpop.f32.mrf.mxu0
        %v602 = vadd.f32 %v529, %v601
        %603 = vmatmul.f32.gmra.mxu0 %v547
        %v604 = vpop.f32.mrf.mxu0
        %v605 = vadd.f32 %v534, %v604
        %606 = vdwg.mxu0
        %v607 = vtanh.pop %v567
        %v608 = vtanh.pop %v596
        %v609 = vtanh.pop %v570
        %v610 = vtanh.pop %v599
        %v611 = vtanh.pop %v573
        %v612 = vtanh.pop %v602
        %v613 = vtanh.pop %v576
        %v614 = vtanh.pop %v605
        %v615 = vld [vmem:[%s5] sm:$0xff]
        %v616 = vld [vmem:[%s5 + $0x8] sm:$0xff]
        %v617 = vld [vmem:[%s5 + $0x10] sm:$0xff]
        %v618 = vld [vmem:[%s5 + $0x18] sm:$0xff]
        %v619 = vld [vmem:[%s6] sm:$0xff]
        %v620 = vld [vmem:[%s6 + $0x8] sm:$0xff]
        %v621 = vld [vmem:[%s6 + $0x10] sm:$0xff]
        %v622 = vld [vmem:[%s6 + $0x18] sm:$0xff]
        %624 = vset.pattern.permute.xlu0 0
        %625 = vperm.xlu0 %624, %v619
        %v626 = vpop.permute.xlu0 %625
        %629 = vset.pattern.permute.xlu0 0
        %630 = vperm.xlu0 %629, %v620
        %v631 = vpop.permute.xlu0 %630
        %634 = vset.pattern.permute.xlu0 0
        %635 = vperm.xlu0 %634, %v621
        %v636 = vpop.permute.xlu0 %635
        %639 = vset.pattern.permute.xlu0 0
        %640 = vperm.xlu0 %639, %v622
        %v641 = vpop.permute.xlu0 %640
        %v644 = vsel %vm536, %v615, 0
        %v647 = vsel %vm536, %v616, 0
        %v650 = vsel %vm536, %v617, 0
        %v653 = vsel %vm536, %v618, 0
        %655 = vmatpush.msra.mxu0 0.0
        %656 = vmatpush.msra.mxu0 0.0
        %657 = vmatpush.msra.mxu0 0.0
        %658 = vmatpush.msra.mxu0 0.0
        %659 = vmatpush.msra.mxu0 0.0
        %660 = vmatpush.msra.mxu0 0.0
        %661 = vmatpush.msra.mxu0 0.0
        %662 = vmatpush.msra.mxu0 0.0
        %663 = vmatpush.msra.mxu0 0.0
        %664 = vmatpush.msra.mxu0 0.0
        %665 = vmatpush.msra.mxu0 0.0
        %666 = vmatpush.msra.mxu0 0.0
        %667 = vmatpush.msra.mxu0 %v613
        %668 = vmatpush.msra.mxu0 %v611
        %669 = vmatpush.msra.mxu0 %v609
        %670 = vmatpush.msra.mxu0 %v607
        %671 = vmatmul.f32.gmra.mxu0 %v644
        %v672 = vpop.f32.mrf.mxu0
        %v673 = vadd.f32 %v626, %v672
        %674 = vmatmul.f32.gmra.mxu0 %v647
        %v675 = vpop.f32.mrf.mxu0
        %v676 = vadd.f32 %v631, %v675
        %677 = vmatmul.f32.gmra.mxu0 %v650
        %v678 = vpop.f32.mrf.mxu0
        %v679 = vadd.f32 %v636, %v678
        %680 = vmatmul.f32.gmra.mxu0 %v653
        %v681 = vpop.f32.mrf.mxu0
        %v682 = vadd.f32 %v641, %v681
        %683 = vdwg.mxu0
        %684 = vmatpush.msra.mxu0 0.0
        %685 = vmatpush.msra.mxu0 0.0
        %686 = vmatpush.msra.mxu0 0.0
        %687 = vmatpush.msra.mxu0 0.0
        %688 = vmatpush.msra.mxu0 0.0
        %689 = vmatpush.msra.mxu0 0.0
        %690 = vmatpush.msra.mxu0 0.0
        %691 = vmatpush.msra.mxu0 0.0
        %692 = vmatpush.msra.mxu0 0.0
        %693 = vmatpush.msra.mxu0 0.0
        %694 = vmatpush.msra.mxu0 0.0
        %695 = vmatpush.msra.mxu0 0.0
        %696 = vmatpush.msra.mxu0 %v614
        %697 = vmatpush.msra.mxu0 %v612
        %698 = vmatpush.msra.mxu0 %v610
        %699 = vmatpush.msra.mxu0 %v608
        %700 = vmatmul.f32.gmra.mxu0 %v644
        %v701 = vpop.f32.mrf.mxu0
        %v702 = vadd.f32 %v626, %v701
        %703 = vmatmul.f32.gmra.mxu0 %v647
        %v704 = vpop.f32.mrf.mxu0
        %v705 = vadd.f32 %v631, %v704
        %706 = vmatmul.f32.gmra.mxu0 %v650
        %v707 = vpop.f32.mrf.mxu0
        %v708 = vadd.f32 %v636, %v707
        %709 = vmatmul.f32.gmra.mxu0 %v653
        %v710 = vpop.f32.mrf.mxu0
        %v711 = vadd.f32 %v641, %v710
        %712 = vdwg.mxu0
        %v713 = vtanh.pop %v673
        %v714 = vtanh.pop %v702
        %v715 = vtanh.pop %v676
        %v716 = vtanh.pop %v705
        %v717 = vtanh.pop %v679
        %v718 = vtanh.pop %v708
        %v719 = vtanh.pop %v682
        %v720 = vtanh.pop %v711
        %v721 = vld [vmem:[%s7] sm:$0xff]
        %v722 = vld [vmem:[%s7 + $0x8] sm:$0xff]
        %v723 = vld [vmem:[%s7 + $0x10] sm:$0xff]
        %v724 = vld [vmem:[%s7 + $0x18] sm:$0xff]
        %v725 = vld [vmem:[%s8] sm:$0xff]
        %v726 = vld [vmem:[%s8 + $0x8] sm:$0xff]
        %v727 = vld [vmem:[%s8 + $0x10] sm:$0xff]
        %v728 = vld [vmem:[%s8 + $0x18] sm:$0xff]
        %730 = vset.pattern.permute.xlu0 0
        %731 = vperm.xlu0 %730, %v725
        %v732 = vpop.permute.xlu0 %731
        %735 = vset.pattern.permute.xlu0 0
        %736 = vperm.xlu0 %735, %v726
        %v737 = vpop.permute.xlu0 %736
        %740 = vset.pattern.permute.xlu0 0
        %741 = vperm.xlu0 %740, %v727
        %v742 = vpop.permute.xlu0 %741
        %745 = vset.pattern.permute.xlu0 0
        %746 = vperm.xlu0 %745, %v728
        %v747 = vpop.permute.xlu0 %746
        %v750 = vsel %vm536, %v721, 0
        %v753 = vsel %vm536, %v722, 0
        %v756 = vsel %vm536, %v723, 0
        %v759 = vsel %vm536, %v724, 0
        %761 = vmatpush.msra.mxu0 0.0
        %762 = vmatpush.msra.mxu0 0.0
        %763 = vmatpush.msra.mxu0 0.0
        %764 = vmatpush.msra.mxu0 0.0
        %765 = vmatpush.msra.mxu0 0.0
        %766 = vmatpush.msra.mxu0 0.0
        %767 = vmatpush.msra.mxu0 0.0
        %768 = vmatpush.msra.mxu0 0.0
        %769 = vmatpush.msra.mxu0 0.0
        %770 = vmatpush.msra.mxu0 0.0
        %771 = vmatpush.msra.mxu0 0.0
        %772 = vmatpush.msra.mxu0 0.0
        %773 = vmatpush.msra.mxu0 %v719
        %774 = vmatpush.msra.mxu0 %v717
        %775 = vmatpush.msra.mxu0 %v715
        %776 = vmatpush.msra.mxu0 %v713
        %777 = vmatmul.f32.gmra.mxu0 %v750
        %v778 = vpop.f32.mrf.mxu0
        %v779 = vadd.f32 %v732, %v778
        %780 = vmatmul.f32.gmra.mxu0 %v753
        %v781 = vpop.f32.mrf.mxu0
        %v782 = vadd.f32 %v737, %v781
        %783 = vmatmul.f32.gmra.mxu0 %v756
        %v784 = vpop.f32.mrf.mxu0
        %v785 = vadd.f32 %v742, %v784
        %786 = vmatmul.f32.gmra.mxu0 %v759
        %v787 = vpop.f32.mrf.mxu0
        %v788 = vadd.f32 %v747, %v787
        %789 = vdwg.mxu0
        %790 = vmatpush.msra.mxu0 0.0
        %791 = vmatpush.msra.mxu0 0.0
        %792 = vmatpush.msra.mxu0 0.0
        %793 = vmatpush.msra.mxu0 0.0
        %794 = vmatpush.msra.mxu0 0.0
        %795 = vmatpush.msra.mxu0 0.0
        %796 = vmatpush.msra.mxu0 0.0
        %797 = vmatpush.msra.mxu0 0.0
        %798 = vmatpush.msra.mxu0 0.0
        %799 = vmatpush.msra.mxu0 0.0
        %800 = vmatpush.msra.mxu0 0.0
        %801 = vmatpush.msra.mxu0 0.0
        %802 = vmatpush.msra.mxu0 %v720
        %803 = vmatpush.msra.mxu0 %v718
        %804 = vmatpush.msra.mxu0 %v716
        %805 = vmatpush.msra.mxu0 %v714
        %806 = vmatmul.f32.gmra.mxu0 %v750
        %v807 = vpop.f32.mrf.mxu0
        %v808 = vadd.f32 %v732, %v807
        %809 = vmatmul.f32.gmra.mxu0 %v753
        %v810 = vpop.f32.mrf.mxu0
        %v811 = vadd.f32 %v737, %v810
        %812 = vmatmul.f32.gmra.mxu0 %v756
        %v813 = vpop.f32.mrf.mxu0
        %v814 = vadd.f32 %v742, %v813
        %815 = vmatmul.f32.gmra.mxu0 %v759
        %v816 = vpop.f32.mrf.mxu0
        %v817 = vadd.f32 %v747, %v816
        %818 = vdwg.mxu0
        %v819 = vtanh.pop %v779
        %v820 = vtanh.pop %v808
        %v821 = vtanh.pop %v782
        %v822 = vtanh.pop %v811
        %v823 = vtanh.pop %v785
        %v824 = vtanh.pop %v814
        %v825 = vtanh.pop %v788
        %v826 = vtanh.pop %v817
        %v827 = vld [vmem:[%s9] sm:$0xff]
        %v828 = vld [vmem:[%s9 + $0x8] sm:$0xff]
        %v829 = vld [vmem:[%s9 + $0x10] sm:$0xff]
        %v830 = vld [vmem:[%s9 + $0x18] sm:$0xff]
        %832 = vset.pattern.permute.xlu0 0
        %833 = vperm.xlu0 %832, %v827
        %v834 = vpop.permute.xlu0 %833
        %837 = vset.pattern.permute.xlu0 0
        %838 = vperm.xlu0 %837, %v828
        %v839 = vpop.permute.xlu0 %838
        %842 = vset.pattern.permute.xlu0 0
        %843 = vperm.xlu0 %842, %v829
        %v844 = vpop.permute.xlu0 %843
        %847 = vset.pattern.permute.xlu0 0
        %848 = vperm.xlu0 %847, %v830
        %v849 = vpop.permute.xlu0 %848
        %v851 = vmul.f32 %v834, %v819
        %v852 = vmul.f32 %v834, %v820
        %v853 = vmul.f32 %v839, %v821
        %v854 = vmul.f32 %v839, %v822
        %v855 = vmul.f32 %v844, %v823
        %v856 = vmul.f32 %v844, %v824
        %v857 = vmul.f32 %v849, %v825
        %v858 = vmul.f32 %v849, %v826
        %v859 = vadd.f32 %v851, %v853
        %v860 = vadd.f32 %v859, %v855
        %v861 = vadd.f32 %v860, %v857
        %v862 = vrot.slane %v861, 4
        %v863 = vadd.f32 %v861, %v862
        %v864 = vrot.slane %v863, 2
        %v865 = vadd.f32 %v863, %v864
        %v866 = vrot.slane %v865, 1
        %v867 = vadd.f32 %v865, %v866
        %v868 = vadd.f32 %v852, %v854
        %v869 = vadd.f32 %v868, %v856
        %v870 = vadd.f32 %v869, %v858
        %v871 = vrot.slane %v870, 4
        %v872 = vadd.f32 %v870, %v871
        %v873 = vrot.slane %v872, 2
        %v874 = vadd.f32 %v872, %v873
        %v875 = vrot.slane %v874, 1
        %v876 = vadd.f32 %v874, %v875
        %v877 = vld [vmem:[#allocation2] sm:$0x1]
        %879 = vset.pattern.permute.xlu0 0
        %880 = vperm.xlu0 %879, %v877
        %v881 = vpop.permute.xlu0 %880
        %v883 = vperm.slane %v881, 0
        %v884 = vadd.f32 %v867, %v883
        %v885 = vadd.f32 %v876, %v883
        %v888 = vrot.slane %v885, 7
        %vm889 = vcmask 1040384
        %v890 = vsel %vm889, %v884, %v888
        %v892 = vlaneseq
        %vm893 = vcmp.ge.s32.totalorder %v892, 0
        %vm894 = vcmp.lt.s32.totalorder %v892, 256
        %vm895 = vmand %vm893, %vm894
        %896 = vst.msk [vmem:[%s382] sm:$0x3] %vm895, %v890
        %s897 = sand.u32 %s271, 1
        %s898 = scalar_lea.sflag [#allocation4], %s897
        %s899 = sand.u32 %s271, 1
        %s900 = smul.addr %s899, 2
        %s901 = scalar_lea.vmem [#allocation3], %s900
        // Predicated region
        $region65: #{tpu_custom_call.1} parent=63 // pred_check
          %p902 = pneg %p281
        $region66: #{tpu_custom_call.1} parent=63 // pred_check_branch
          %904 = sbr.rel (%p902) target = $region68
        $region67: #{tpu_custom_call.1} parent=63 // pred_region
          %s905 = smul.u32 2, %s27
          %907 = vsyncadd %s898, 0
          %s908 = scalar_lea.hbm %s11, %s905
          %s910 = sshll.u32 %s901, 4
          %s911 = int_to_ptr.vmem [resolvable:$true] %s910
          %s912 = sshll.u32 %s908, 4
          %s913 = int_to_ptr.hbm [resolvable:$true] %s912
          %915 = dma.vmem_to_hbm [thread:$0]  %s911, 32, %s913, %s898
        $region68: #{tpu_custom_call.1} parent=63 // pred_fallthru
          _
      $region64: #{tpu_custom_call.1} parent=5 // pred_fallthru
        _
      %p916 = scmp.le.s32.totalorder 2, %s22
      // Predicated region
      $region69: #{tpu_custom_call.1} parent=5 // pred_check
        %p917 = pneg %p916
      $region70: #{tpu_custom_call.1} parent=5 // pred_check_branch
        %919 = sbr.rel (%p917) target = $region72
      $region71: #{tpu_custom_call.1} parent=5 // pred_region
        %s920 = ssub.s32 %s22, 2
        // Predicated region
        $region73: #{tpu_custom_call.1} parent=71 // pred_check
          %p921 = pneg %p287
        $region74: #{tpu_custom_call.1} parent=71 // pred_check_branch
          %923 = sbr.rel (%p921) target = $region76
        $region75: #{tpu_custom_call.1} parent=71 // pred_region
          %s924 = sand.u32 %s272, 1
          %s925 = scalar_lea.sflag [#allocation4], %s924
          %s926 = sand.u32 %s272, 1
          %s927 = smul.addr %s926, 2
          %s928 = scalar_lea.vmem [#allocation3], %s927
          %930 = dma.done %s925, 32
        $region76: #{tpu_custom_call.1} parent=71 // pred_fallthru
          _
      $region72: #{tpu_custom_call.1} parent=5 // pred_fallthru
        _
    $region6: #{tpu_custom_call.1} parent=1 // loop_footer
      %s26 = sadd.s32 1, %s22
    $region7: #{tpu_custom_call.1} parent=1 // loop_footer_branch
      %21 = sbr.rel target = $region3
    $region8: #{tpu_custom_call.1} parent=1 // loop_exit
      _
    %931 = vsyncpa [#allocation4], 1
    %s932 = scalar_lea.sflag [#allocation4], 1
    %933 = vsyncpa %s932, 1

</llo_original>
